<compile_context>
chip_gen: v7x
topology: tpu7x:2x2x1
jax: 0.10.0
libtpu: 0.0.40
codegen_flags: <defaults>
</compile_context>

<pallas_src>
import functools

import jax
import jax.numpy as jnp
from jax.experimental import pallas as pl
from jax.experimental.pallas import tpu as pltpu

SIGMA = 0.05


def _pick_tile(total, target):
    """Largest tile that exactly divides `total`: the full extent if total<=target,
    otherwise the largest multiple-of-8 divisor <= target (falls back to `total`)."""
    if total <= target:
        return total
    for t in range(target - target % 8, 7, -8):
        if total % t == 0:
            return t
    # TODO(synk): ragged-tail handling (pad + in-kernel mask) for sizes with no mult-of-8 divisor.
    return total


# ----------------------------------------------------------------------------
# TokenClassifier MLP kernel:  y = relu(x @ W1 + b1) @ W2 + b2
# Grid over the flattened token axis; weights/biases use constant index_maps so
# they stay VMEM-resident across grid steps. Operands keep their input dtype so
# bf16 inputs hit the native bf16 MXU path (accumulation in f32).
# ----------------------------------------------------------------------------
def token_mlp_kernel(x_ref, w1_ref, b1_ref, w2_ref, b2_ref, out_ref):
    h = jnp.dot(x_ref[...], w1_ref[...], preferred_element_type=jnp.float32)   # (TM, H)
    h = jnp.maximum(h + b1_ref[...].astype(jnp.float32), 0.0)
    h = h.astype(w2_ref.dtype)  # bf16 weights -> bf16 MXU second matmul; no-op for f32
    y = jnp.dot(h, w2_ref[...], preferred_element_type=jnp.float32)            # (TM, K)
    out_ref[...] = (y + b2_ref[...].astype(jnp.float32)).astype(out_ref.dtype)


def token_classifier_forward(x_nbc, w1, b1, w2, b2):
    """x_nbc: (N, B, C); weights in (in, out) layout. Returns (N, B, K) f32."""
    N, B, C = x_nbc.shape
    H = w1.shape[1]
    K = w2.shape[1]
    M = N * B
    TM = _pick_tile(M, 512)
    x2 = x_nbc.reshape(M, C)

    out = pl.pallas_call(
        token_mlp_kernel,
        out_shape=jax.ShapeDtypeStruct((M, K), jnp.float32),
        grid_spec=pltpu.PrefetchScalarGridSpec(
            num_scalar_prefetch=0,
            grid=(M // TM,),
            in_specs=[
                pl.BlockSpec((TM, C), lambda i: (i, 0)),
                pl.BlockSpec((C, H), lambda i: (0, 0)),
                pl.BlockSpec((1, H), lambda i: (0, 0)),
                pl.BlockSpec((H, K), lambda i: (0, 0)),
                pl.BlockSpec((1, K), lambda i: (0, 0)),
            ],
            out_specs=pl.BlockSpec((TM, K), lambda i: (i, 0)),
        ),
        compiler_params=pltpu.CompilerParams(dimension_semantics=("parallel",)),
    )(x2, w1, b1, w2, b2)
    return out.reshape(N, B, K)


# ----------------------------------------------------------------------------
# KL attention-distillation loss kernel (top_k=None branch of KL(...))
# grid = (bsz, num_heads, S//TQ); per-(b,h) partial sum accumulated over the
# query-tile axis (last, "arbitrary" axis); b/h axes are "parallel".
# Valid mask arrives pre-sliced per batch via BlockSpec (no iota/where work).
# ----------------------------------------------------------------------------
def kl_loss_kernel(inp_ref, tgt_ref, vrow_ref, vcol_ref, out_ref):
    q = pl.program_id(2)

    x = inp_ref[0, 0].astype(jnp.float32)   # (TQ, S) student attn logits
    t = tgt_ref[0, 0].astype(jnp.float32)   # (TQ, S) teacher attn logits

    # log_softmax along the last (key) axis — exact under query tiling
    lx = x - jnp.max(x, axis=-1, keepdims=True)
    lx = lx - jnp.log(jnp.sum(jnp.exp(lx), axis=-1, keepdims=True))
    lt = t - jnp.max(t, axis=-1, keepdims=True)
    lt = lt - jnp.log(jnp.sum(jnp.exp(lt), axis=-1, keepdims=True))
    pt = jnp.exp(lt)
    kl = pt * (lt - lx)                     # F.kl_div(log_softmax(x), softmax(t), 'none')

    vmask = vcol_ref[0] * vrow_ref[0]       # (TQ,1)*(1,S) -> (TQ,S)
    partial = jnp.sum(kl * vmask)

    @pl.when(q == 0)
    def _init():
        out_ref[...] = jnp.zeros_like(out_ref)

    out_ref[...] = out_ref[...] + partial


def kl_attention_loss(attn_input, attn_target, valid_tokens_float):
    """attn_*: (bsz, num_heads, S, S) — any float dtype (kept as-is in HBM);
    valid_tokens_float: (S, bsz) as in the PyTorch source."""
    bsz, nh, S = attn_input.shape[:3]
    TQ = _pick_tile(S, 512)
    nq = S // TQ

    v_bs = jnp.transpose(valid_tokens_float, (1, 0)).astype(jnp.float32)   # (bsz, S), tiny
    v_row = v_bs.reshape(bsz, 1, S)
    v_col = v_bs.reshape(bsz, S, 1)

    partials = pl.pallas_call(
        kl_loss_kernel,
        out_shape=jax.ShapeDtypeStruct((bsz, nh, 1, 1), jnp.float32),
        grid_spec=pltpu.PrefetchScalarGridSpec(
            num_scalar_prefetch=0,
            grid=(bsz, nh, nq),
            in_specs=[
                pl.BlockSpec((1, 1, TQ, S), lambda b, h, q: (b, h, q, 0)),
                pl.BlockSpec((1, 1, TQ, S), lambda b, h, q: (b, h, q, 0)),
                pl.BlockSpec((1, 1, S), lambda b, h, q: (b, 0, 0)),
                pl.BlockSpec((1, TQ, 1), lambda b, h, q: (b, q, 0)),
            ],
            out_specs=pl.BlockSpec((1, 1, 1, 1), lambda b, h, q: (b, h, 0, 0)),
        ),
        compiler_params=pltpu.CompilerParams(
            dimension_semantics=("parallel", "parallel", "arbitrary")),
    )(attn_input, attn_target, v_row, v_col)

    # weight / denominator hoisted out of the kernel
    weight = jnp.sum(v_bs) / jnp.float32(v_bs.size)
    return jnp.sum(partials) / (jnp.float32(bsz * nh * S) * weight)


# ----------------------------------------------------------------------------
# MSE feature-distillation loss kernel — flattened (N*B, C) tiles, per-tile
# partial sums; normalization in the wrapper.
# ----------------------------------------------------------------------------
def mse_loss_kernel(x_ref, t_ref, v_ref, out_ref):
    x = x_ref[...].astype(jnp.float32)   # (TM, C)
    t = t_ref[...].astype(jnp.float32)   # (TM, C)
    v = v_ref[...].astype(jnp.float32)   # (TM, 1)
    d = x - t
    out_ref[...] = jnp.sum(d * d * v) + jnp.zeros((1, 1, 1), jnp.float32)


def mse_feature_distill_loss(feat_input, feat_target, valid_tokens_float):
    """feat_*: (N, B, C) — any float dtype (kept as-is in HBM); valid_tokens_float: (N, B)."""
    N, B, C = feat_input.shape
    M = N * B
    TM = _pick_tile(M, 1024)
    nt = M // TM

    x2 = feat_input.reshape(M, C)                               # free row-major reshape
    t2 = feat_target.reshape(M, C)
    v2 = valid_tokens_float.reshape(M, 1).astype(jnp.float32)   # tiny

    partials = pl.pallas_call(
        mse_loss_kernel,
        out_shape=jax.ShapeDtypeStruct((nt, 1, 1), jnp.float32),
        grid_spec=pltpu.PrefetchScalarGridSpec(
            num_scalar_prefetch=0,
            grid=(nt,),
            in_specs=[
                pl.BlockSpec((TM, C), lambda i: (i, 0)),
                pl.BlockSpec((TM, C), lambda i: (i, 0)),
                pl.BlockSpec((TM, 1), lambda i: (i, 0)),
            ],
            out_specs=pl.BlockSpec((1, 1, 1), lambda i: (i, 0, 0)),
        ),
        compiler_params=pltpu.CompilerParams(dimension_semantics=("parallel",)),
    )(x2, t2, v2)

    weight = jnp.sum(v2) / jnp.float32(M)
    return jnp.sum(partials) / (jnp.float32(M) * weight)


# ----------------------------------------------------------------------------
# FgBgClassifier forward (reproduces the PyTorch post-processing exactly,
# including the original `[:, -1]` indexing on dim 1 — a latent upstream bug:
# it selects the last *batch* element, not the foreground class probability).
# ----------------------------------------------------------------------------
def fg_bg_classifier_forward(teacher_encoder_output_list, params):
    w1, b1, w2, b2 = params
    classification_logits = [
        token_classifier_forward(o['feat'] if isinstance(o, dict) else o, w1, b1, w2, b2)
        for o in teacher_encoder_output_list]
    last = classification_logits[-1]                      # (N, B, 2)
    prob = jax.nn.softmax(last, axis=-1)[:, -1]           # (N, 2) — faithful to PyTorch source
    tokens_to_split = jnp.argmax(last, axis=-1)           # (N, B)
    tokens_to_discard = 1 - tokens_to_split
    vis_data = {
        'tokens_small_obj': tokens_to_split,
        'tokens_to_discard': tokens_to_discard,
        'tokens_to_discard_original': tokens_to_discard,
        'tokens_to_split_original': tokens_to_split,
        'fg_score': prob,
        'small_scale_score': prob,
    }
    return {'sgdt_token_classification_output_list': classification_logits,
            'sgdt_vis_data': vis_data}


# ----------------------------------------------------------------------------
# GTRatioOrSigma: pure-Python scalar scheduling (no kernel needed)
# ----------------------------------------------------------------------------
class GTRatioOrSigma:
    def __init__(self, gt_decay_criterion, data_size, total_epoch, decay_sigma=False):
        self.gt_decay_criterion = gt_decay_criterion
        self.data_size = data_size
        self.total_epoch = total_epoch
        self.gt_ratio = 1.0
        self.sigma = SIGMA
        self.decay_sigma = decay_sigma

    def update(self, cur_epoch, cur_iter):
        if self.decay_sigma:
            total_steps = self.data_size * self.total_epoch
            cur_step = cur_epoch * self.data_size + cur_iter
            self.sigma = SIGMA * (1 - cur_step / total_steps)


# ----------------------------------------------------------------------------
# pure-JAX references (correctness check only)
# ----------------------------------------------------------------------------
def _kl_ref(inp, tgt, valid):
    inp = inp.astype(jnp.float32)
    tgt = tgt.astype(jnp.float32)
    bsz, nh, S = inp.shape[:3]
    vm = jnp.einsum('ib,jb->bij', valid, valid)[:, None]  # (b,1,S,S)
    lsx = jax.nn.log_softmax(inp, axis=-1)
    lst = jax.nn.log_softmax(tgt, axis=-1)
    kl = jnp.exp(lst) * (lst - lsx)
    weight = jnp.sum(valid) / valid.size
    return jnp.sum(kl * vm) / (bsz * nh * S * weight)


def _mse_ref(inp, tgt, valid):
    inp = inp.astype(jnp.float32)
    tgt = tgt.astype(jnp.float32)
    N, B, C = inp.shape
    weight = jnp.sum(valid) / valid.size
    return jnp.sum((inp - tgt) ** 2 * valid[:, :, None]) / (B * N * weight)


if __name__ == "__main__":
    key = jax.random.PRNGKey(0)
    k_x, k_fs, k_ft, k_ai, k_at, k_v, k_w1, k_w2 = jax.random.split(key, 8)

    # small shapes consistent with the module
    N, B, C = 8, 2, 32          # tokens, batch, hidden_dim
    HID, K = C // 2, 2          # TokenClassifier hidden / num_class
    NH = 2                      # attention heads
    S = N                       # src_len

    # classifier parameters (torch Linear shapes, stored as (in, out))
    w1 = jax.random.normal(k_w1, (C, HID), jnp.float32) * 0.02
    b1 = jnp.zeros((1, HID), jnp.float32)
    w2 = jax.random.normal(k_w2, (HID, K), jnp.float32) * 0.02
    b2 = jnp.zeros((1, K), jnp.float32)

    # classifier input (f32, matching torch Linear semantics)
    x_cls = jax.random.normal(k_x, (N, B, C), jnp.float32)

    # distillation inputs kept in bf16 end-to-end (kernels cast tiles to f32 internally)
    feat_s = jax.random.normal(k_fs, (N, B, C), jnp.float32).astype(jnp.bfloat16)
    feat_t = jax.random.normal(k_ft, (N, B, C), jnp.float32).astype(jnp.bfloat16)
    attn_s = jax.random.normal(k_ai, (B, NH, S, S), jnp.float32).astype(jnp.bfloat16)
    attn_t = jax.random.normal(k_at, (B, NH, S, S), jnp.float32).astype(jnp.bfloat16)

    valid = (jax.random.uniform(k_v, (S, B)) < 0.75).astype(jnp.float32)  # (S, B) torch layout
    valid = valid.at[0].set(1.0)  # guarantee nonzero weight

    gt_sched = GTRatioOrSigma(None, data_size=10, total_epoch=12, decay_sigma=True)
    gt_sched.update(cur_epoch=1, cur_iter=3)

    # --- run kernels ---
    cls_out = fg_bg_classifier_forward([{'feat': x_cls}], (w1, b1, w2, b2))
    logits = cls_out['sgdt_token_classification_output_list'][-1]
    kl_loss = kl_attention_loss(attn_s, attn_t, valid)
    mse_loss = mse_feature_distill_loss(feat_s, feat_t, valid)

    jax.block_until_ready((logits, kl_loss, mse_loss))

    # --- correctness checks against pure-JAX references ---
    logits_ref = jnp.maximum(x_cls.reshape(N * B, C) @ w1 + b1, 0.0) @ w2 + b2
    assert jnp.allclose(logits.reshape(N * B, K), logits_ref, atol=1e-4)
    assert jnp.allclose(kl_loss, _kl_ref(attn_s, attn_t, valid), atol=1e-4)
    assert jnp.allclose(mse_loss, _mse_ref(feat_s, feat_t, valid), atol=1e-3)

    print("KERNEL_OK")
</pallas_src>

<mosaic_0001>
module attributes {stable_mosaic.version = 11 : i64} {
  func.func @token_mlp_kernel(%arg0: i32, %arg1: memref<16x32xf32, #tpu.memory_space<vmem>>, %arg2: memref<32x16xf32, #tpu.memory_space<vmem>>, %arg3: memref<1x16xf32, #tpu.memory_space<vmem>>, %arg4: memref<16x2xf32, #tpu.memory_space<vmem>>, %arg5: memref<1x2xf32, #tpu.memory_space<vmem>>, %arg6: memref<16x2xf32, #tpu.memory_space<vmem>>) attributes {dimension_semantics = [#tpu.dimension_semantics<parallel>], iteration_bounds = array<i64: 1>, scalar_prefetch = 0 : i64, scratch_operands = 0 : i64, tpu.core_type = #tpu.core_type<tc>, window_params = [{transform_indices = @transform_0, window_bounds = array<i64: 16, 32>}, {pipeline_mode = #tpu.pipeline_mode<synchronous>, transform_indices = @transform_1, window_bounds = array<i64: 32, 16>}, {pipeline_mode = #tpu.pipeline_mode<synchronous>, transform_indices = @transform_2, window_bounds = array<i64: 1, 16>}, {pipeline_mode = #tpu.pipeline_mode<synchronous>, transform_indices = @transform_3, window_bounds = array<i64: 16, 2>}, {pipeline_mode = #tpu.pipeline_mode<synchronous>, transform_indices = @transform_4, window_bounds = array<i64: 1, 2>}, {transform_indices = @transform_5, window_bounds = array<i64: 16, 2>}]} {
    %c0 = arith.constant 0 : index
    %c0_0 = arith.constant 0 : index
    %0 = vector.load %arg1[%c0, %c0_0] : memref<16x32xf32, #tpu.memory_space<vmem>>, vector<16x32xf32>
    %c0_1 = arith.constant 0 : index
    %c0_2 = arith.constant 0 : index
    %1 = vector.load %arg2[%c0_1, %c0_2] : memref<32x16xf32, #tpu.memory_space<vmem>>, vector<32x16xf32>
    %cst = arith.constant dense<0.000000e+00> : vector<16x16xf32>
    %2 = tpu.matmul %0, %1, %cst {dimension_numbers = #tpu.dot_dimension_numbers<[1], [0], [0], [1], [0, 0, 1, 1], [], []>} : vector<16x32xf32>, vector<32x16xf32>, vector<16x16xf32> -> vector<16x16xf32>
    %c0_3 = arith.constant 0 : index
    %c0_4 = arith.constant 0 : index
    %3 = vector.load %arg3[%c0_3, %c0_4] : memref<1x16xf32, #tpu.memory_space<vmem>>, vector<1x16xf32>
    %4 = vector.broadcast %3 : vector<1x16xf32> to vector<16x16xf32>
    %5 = arith.addf %2, %4 : vector<16x16xf32>
    %cst_5 = arith.constant 0.000000e+00 : f32
    %6 = vector.broadcast %cst_5 : f32 to vector<16x16xf32>
    %7 = arith.maximumf %5, %6 : vector<16x16xf32>
    %c0_6 = arith.constant 0 : index
    %c0_7 = arith.constant 0 : index
    %8 = vector.load %arg4[%c0_6, %c0_7] : memref<16x2xf32, #tpu.memory_space<vmem>>, vector<16x2xf32>
    %cst_8 = arith.constant dense<0.000000e+00> : vector<16x2xf32>
    %9 = tpu.matmul %7, %8, %cst_8 {dimension_numbers = #tpu.dot_dimension_numbers<[1], [0], [0], [1], [0, 0, 1, 1], [], []>} : vector<16x16xf32>, vector<16x2xf32>, vector<16x2xf32> -> vector<16x2xf32>
    %c0_9 = arith.constant 0 : index
    %c0_10 = arith.constant 0 : index
    %10 = vector.load %arg5[%c0_9, %c0_10] : memref<1x2xf32, #tpu.memory_space<vmem>>, vector<1x2xf32>
    %11 = vector.broadcast %10 : vector<1x2xf32> to vector<16x2xf32>
    %12 = arith.addf %9, %11 : vector<16x2xf32>
    %c0_11 = arith.constant 0 : index
    %c0_12 = arith.constant 0 : index
    %13 = vector.load %arg6[%c0_11, %c0_12] : memref<16x2xf32, #tpu.memory_space<vmem>>, vector<16x2xf32>
    tpu.vector_store %arg6[%c0_11, %c0_12], %12 {strides = array<i32>} : memref<16x2xf32, #tpu.memory_space<vmem>>, vector<16x2xf32>,
    return
  }
  func.func @transform_0(%arg0: i32) -> (i32, i32) {
    %c0_i32 = arith.constant 0 : i32
    %c0_i32_0 = arith.constant 0 : i32
    return %arg0, %c0_i32 : i32, i32
  }
  func.func @transform_1(%arg0: i32) -> (i32, i32) {
    %c0_i32 = arith.constant 0 : i32
    %c0_i32_0 = arith.constant 0 : i32
    %c0_i32_1 = arith.constant 0 : i32
    return %c0_i32, %c0_i32_0 : i32, i32
  }
  func.func @transform_2(%arg0: i32) -> (i32, i32) {
    %c0_i32 = arith.constant 0 : i32
    %c0_i32_0 = arith.constant 0 : i32
    %c0_i32_1 = arith.constant 0 : i32
    return %c0_i32, %c0_i32_0 : i32, i32
  }
  func.func @transform_3(%arg0: i32) -> (i32, i32) {
    %c0_i32 = arith.constant 0 : i32
    %c0_i32_0 = arith.constant 0 : i32
    %c0_i32_1 = arith.constant 0 : i32
    return %c0_i32, %c0_i32_0 : i32, i32
  }
  func.func @transform_4(%arg0: i32) -> (i32, i32) {
    %c0_i32 = arith.constant 0 : i32
    %c0_i32_0 = arith.constant 0 : i32
    %c0_i32_1 = arith.constant 0 : i32
    return %c0_i32, %c0_i32_0 : i32, i32
  }
  func.func @transform_5(%arg0: i32) -> (i32, i32) {
    %c0_i32 = arith.constant 0 : i32
    %c0_i32_0 = arith.constant 0 : i32
    return %arg0, %c0_i32 : i32, i32
  }
}

</mosaic_0001>

<llo_original>
// kernel: tpu_custom_call.1
$region0: #{tpu_custom_call.1}
  #allocation0 [shape = 'u32[]', space=smem, size = 0x4, offset = 0x4, fixed_abs, tag = 'smem constant byte address 0x4 - core index']
  #allocation1 [shape = 'u32[144,128]{1,0:T(1,128)}', space=vmem, size = 0x12000, scoped, tag = 'internal scratch']
  %s0 = inlined_call_operand.vmem [shape: f32[16,32], index: 0, kind: input, shape index: {}]
  %s1 = inlined_call_operand.vmem [shape: f32[32,16], index: 1, kind: input, shape index: {}]
  %s2 = inlined_call_operand.vmem [shape: f32[1,16], index: 2, kind: input, shape index: {}]
  %s3 = inlined_call_operand.vmem [shape: f32[16,2], index: 3, kind: input, shape index: {}]
  %s4 = inlined_call_operand.vmem [shape: f32[1,2], index: 4, kind: input, shape index: {}]
  %s5 = inlined_call_operand.vmem [shape: f32[16,2], index: 5, kind: output, shape index: {}]
  %s6 = sld [smem:[#allocation0]]
  $region30: #{tpu_custom_call.1} parent=0
    _
  %s8 = ssub.s32 1, %s6
  %s9 = scalar_select 0, %s8, %s6
  // Predicated region
  $region2: #{tpu_custom_call.1} parent=0 // pred_check
    _
  $region3: #{tpu_custom_call.1} parent=0 // pred_check_branch
    %11 = sbr.rel (0) target = $region5
  $region4: #{tpu_custom_call.1} parent=0 // pred_region
    _
  $region5: #{tpu_custom_call.1} parent=0 // pred_fallthru
    _
  // Predicated region
  $region6: #{tpu_custom_call.1} parent=0 // pred_check
    _
  $region7: #{tpu_custom_call.1} parent=0 // pred_check_branch
    %13 = sbr.rel (0) target = $region9
  $region8: #{tpu_custom_call.1} parent=0 // pred_region
    _
  $region9: #{tpu_custom_call.1} parent=0 // pred_fallthru
    _
  // Predicated region
  $region10: #{tpu_custom_call.1} parent=0 // pred_check
    _
  $region11: #{tpu_custom_call.1} parent=0 // pred_check_branch
    %15 = sbr.rel (0) target = $region13
  $region12: #{tpu_custom_call.1} parent=0 // pred_region
    _
  $region13: #{tpu_custom_call.1} parent=0 // pred_fallthru
    _
  // Predicated region
  $region14: #{tpu_custom_call.1} parent=0 // pred_check
    _
  $region15: #{tpu_custom_call.1} parent=0 // pred_check_branch
    %17 = sbr.rel (0) target = $region17
  $region16: #{tpu_custom_call.1} parent=0 // pred_region
    _
  $region17: #{tpu_custom_call.1} parent=0 // pred_fallthru
    _
  // Predicated region
  $region18: #{tpu_custom_call.1} parent=0 // pred_check
    _
  $region19: #{tpu_custom_call.1} parent=0 // pred_check_branch
    %19 = sbr.rel (0) target = $region21
  $region20: #{tpu_custom_call.1} parent=0 // pred_region
    _
  $region21: #{tpu_custom_call.1} parent=0 // pred_fallthru
    _
  %v20 = vld [vmem:[%s0] sm:$0xff]
  %v21 = vld [vmem:[%s0 + $0x8] sm:$0xff]
  %v22 = vld [vmem:[%s1] sm:$0xff]
  %v23 = vld [vmem:[%s1 + $0x8] sm:$0xff]
  %v24 = vld [vmem:[%s1 + $0x10] sm:$0xff]
  %v25 = vld [vmem:[%s1 + $0x18] sm:$0xff]
  %v26 = vld [vmem:[%s2] sm:$0x1]
  %v28 = vlaneseq
  %v29 = vshrl.u32 %v28, 7
  %v30 = vsub.s32 0, %v29
  %v31 = vrot.slane %v26, %v30
  %vm33 = vcmask 261120
  %v35 = vsel %vm33, %v20, 0
  %v38 = vsel %vm33, %v21, 0
  %40 = vmatprep.subr.mxu0 0.0
  %41 = vmatpush1.msra.mxu0 %v22
  %42 = vmatprep.subr.mxu0 0.0
  %43 = vmatpush1.msra.mxu0 %v23
  %44 = vmatprep.subr.mxu0 0.0
  %45 = vmatpush1.msra.mxu0 %v24
  %46 = vmatprep.subr.mxu0 0.0
  %47 = vmatpush1.msra.mxu0 %v25
  %48 = vmatprep.subr.mxu0 0.0
  %49 = vmatpush1.msra.mxu0 0.0
  %50 = vmatprep.subr.mxu0 0.0
  %51 = vmatpush1.msra.mxu0 0.0
  %52 = vmatprep.subr.mxu0 0.0
  %53 = vmatpush1.msra.mxu0 0.0
  %54 = vmatprep.subr.mxu0 0.0
  %55 = vmatpush1.msra.mxu0 0.0
  %56 = vmatprep.subr.mxu0 0.0
  %57 = vmatpush1.msra.mxu0 0.0
  %58 = vmatprep.subr.mxu0 0.0
  %59 = vmatpush1.msra.mxu0 0.0
  %60 = vmatprep.subr.mxu0 0.0
  %61 = vmatpush1.msra.mxu0 0.0
  %62 = vmatprep.subr.mxu0 0.0
  %63 = vmatpush1.msra.mxu0 0.0
  %64 = vmatprep.subr.mxu0 0.0
  %65 = vmatpush1.msra.mxu0 0.0
  %66 = vmatprep.subr.mxu0 0.0
  %67 = vmatpush1.msra.mxu0 0.0
  %68 = vmatprep.subr.mxu0 0.0
  %69 = vmatpush1.msra.mxu0 0.0
  %70 = vmatprep.subr.mxu0 0.0
  %71 = vmatpush1.msra.mxu0 0.0
  %72 = vmatprep.subr.mxu0 0.0
  %73 = vmatpush1.msra.mxu0 0.0
  %74 = vmatprep.subr.mxu0 0.0
  %75 = vmatpush1.msra.mxu0 0.0
  %76 = vmatprep.subr.mxu0 0.0
  %77 = vmatpush1.msra.mxu0 0.0
  %78 = vmatprep.subr.mxu0 0.0
  %79 = vmatpush1.msra.mxu0 0.0
  %80 = vmatprep.subr.mxu0 0.0
  %81 = vmatpush1.msra.mxu0 0.0
  %82 = vmatprep.subr.mxu0 0.0
  %83 = vmatpush1.msra.mxu0 0.0
  %84 = vmatprep.subr.mxu0 0.0
  %85 = vmatpush1.msra.mxu0 0.0
  %86 = vmatprep.subr.mxu0 0.0
  %87 = vmatpush1.msra.mxu0 0.0
  %88 = vmatprep.subr.mxu0 0.0
  %89 = vmatpush1.msra.mxu0 0.0
  %90 = vmatprep.subr.mxu0 0.0
  %91 = vmatpush1.msra.mxu0 0.0
  %92 = vmatprep.subr.mxu0 0.0
  %93 = vmatpush1.msra.mxu0 0.0
  %94 = vmatprep.subr.mxu0 0.0
  %95 = vmatpush1.msra.mxu0 0.0
  %96 = vmatprep.subr.mxu0 0.0
  %97 = vmatpush1.msra.mxu0 0.0
  %98 = vmatprep.subr.mxu0 0.0
  %99 = vmatpush1.msra.mxu0 0.0
  %100 = vmatprep.subr.mxu0 0.0
  %101 = vmatpush1.msra.mxu0 0.0
  %102 = vmatprep.subr.mxu0 0.0
  %103 = vmatpush1.msra.mxu0 0.0
  %104 = vmatprep.mubr.f32.mxu0 0.0
  %105 = vmatmul.mubr.f32.gmra.mrb[0].mxu0 %v35
  %v106 = vpop.f32.mrb[0].mxu0
  %v107 = vadd.f32 %v31, %v106
  %v108 = vpop.f32.mrb[0].mxu0
  %109 = vmatprep.mubr.f32.mxu0 0.0
  %110 = vmatmul.mubr.f32.gmra.mrb[0].mxu0 %v38
  %v111 = vpop.f32.mrb[0].mxu0
  %v112 = vadd.f32 %v31, %v111
  %v113 = vpop.f32.mrb[0].mxu0
  %114 = vdwg.mxu0
  %v115 = vmax.f32 %v107, 0.0
  %v116 = vmax.f32 %v112, 0.0
  %v117 = vld [vmem:[%s3] sm:$0xff]
  %v118 = vld [vmem:[%s3 + $0x8] sm:$0xff]
  %v119 = vld [vmem:[%s4] sm:$0x1]
  %v121 = vlaneseq
  %v122 = vshrl.u32 %v121, 7
  %v123 = vsub.s32 0, %v122
  %v124 = vrot.slane %v119, %v123
  %vm126 = vcmask 130048
  %v128 = vsel %vm126, %v115, 0
  %v131 = vsel %vm126, %v116, 0
  %133 = vmatprep.subr.mxu0 0.0
  %134 = vmatpush1.msra.mxu0 %v117
  %135 = vmatprep.subr.mxu0 0.0
  %136 = vmatpush1.msra.mxu0 %v118
  %137 = vmatprep.subr.mxu0 0.0
  %138 = vmatpush1.msra.mxu0 0.0
  %139 = vmatprep.subr.mxu0 0.0
  %140 = vmatpush1.msra.mxu0 0.0
  %141 = vmatprep.subr.mxu0 0.0
  %142 = vmatpush1.msra.mxu0 0.0
  %143 = vmatprep.subr.mxu0 0.0
  %144 = vmatpush1.msra.mxu0 0.0
  %145 = vmatprep.subr.mxu0 0.0
  %146 = vmatpush1.msra.mxu0 0.0
  %147 = vmatprep.subr.mxu0 0.0
  %148 = vmatpush1.msra.mxu0 0.0
  %149 = vmatprep.subr.mxu0 0.0
  %150 = vmatpush1.msra.mxu0 0.0
  %151 = vmatprep.subr.mxu0 0.0
  %152 = vmatpush1.msra.mxu0 0.0
  %153 = vmatprep.subr.mxu0 0.0
  %154 = vmatpush1.msra.mxu0 0.0
  %155 = vmatprep.subr.mxu0 0.0
  %156 = vmatpush1.msra.mxu0 0.0
  %157 = vmatprep.subr.mxu0 0.0
  %158 = vmatpush1.msra.mxu0 0.0
  %159 = vmatprep.subr.mxu0 0.0
  %160 = vmatpush1.msra.mxu0 0.0
  %161 = vmatprep.subr.mxu0 0.0
  %162 = vmatpush1.msra.mxu0 0.0
  %163 = vmatprep.subr.mxu0 0.0
  %164 = vmatpush1.msra.mxu0 0.0
  %165 = vmatprep.subr.mxu0 0.0
  %166 = vmatpush1.msra.mxu0 0.0
  %167 = vmatprep.subr.mxu0 0.0
  %168 = vmatpush1.msra.mxu0 0.0
  %169 = vmatprep.subr.mxu0 0.0
  %170 = vmatpush1.msra.mxu0 0.0
  %171 = vmatprep.subr.mxu0 0.0
  %172 = vmatpush1.msra.mxu0 0.0
  %173 = vmatprep.subr.mxu0 0.0
  %174 = vmatpush1.msra.mxu0 0.0
  %175 = vmatprep.subr.mxu0 0.0
  %176 = vmatpush1.msra.mxu0 0.0
  %177 = vmatprep.subr.mxu0 0.0
  %178 = vmatpush1.msra.mxu0 0.0
  %179 = vmatprep.subr.mxu0 0.0
  %180 = vmatpush1.msra.mxu0 0.0
  %181 = vmatprep.subr.mxu0 0.0
  %182 = vmatpush1.msra.mxu0 0.0
  %183 = vmatprep.subr.mxu0 0.0
  %184 = vmatpush1.msra.mxu0 0.0
  %185 = vmatprep.subr.mxu0 0.0
  %186 = vmatpush1.msra.mxu0 0.0
  %187 = vmatprep.subr.mxu0 0.0
  %188 = vmatpush1.msra.mxu0 0.0
  %189 = vmatprep.subr.mxu0 0.0
  %190 = vmatpush1.msra.mxu0 0.0
  %191 = vmatprep.subr.mxu0 0.0
  %192 = vmatpush1.msra.mxu0 0.0
  %193 = vmatprep.subr.mxu0 0.0
  %194 = vmatpush1.msra.mxu0 0.0
  %195 = vmatprep.subr.mxu0 0.0
  %196 = vmatpush1.msra.mxu0 0.0
  %197 = vmatprep.mubr.f32.mxu0 0.0
  %198 = vmatmul.mubr.f32.gmra.mrb[0].mxu0 %v128
  %v199 = vpop.f32.mrb[0].mxu0
  %v200 = vadd.f32 %v124, %v199
  %v201 = vpop.f32.mrb[0].mxu0
  %202 = vmatprep.mubr.f32.mxu0 0.0
  %203 = vmatmul.mubr.f32.gmra.mrb[0].mxu0 %v131
  %v204 = vpop.f32.mrb[0].mxu0
  %v205 = vadd.f32 %v124, %v204
  %v206 = vpop.f32.mrb[0].mxu0
  %207 = vdwg.mxu0
  %vm208 = vcmask 15360
  %209 = vst.msk [vmem:[%s5] sm:$0xff] %vm208, %v200
  %210 = vst.msk [vmem:[%s5 + $0x8] sm:$0xff] %vm208, %v205
  // Predicated region
  $region22: #{tpu_custom_call.1} parent=0 // pred_check
    _
  $region23: #{tpu_custom_call.1} parent=0 // pred_check_branch
    %212 = sbr.rel (0) target = $region25
  $region24: #{tpu_custom_call.1} parent=0 // pred_region
    _
  $region25: #{tpu_custom_call.1} parent=0 // pred_fallthru
    _
  // Predicated region
  $region26: #{tpu_custom_call.1} parent=0 // pred_check
    _
  $region27: #{tpu_custom_call.1} parent=0 // pred_check_branch
    %214 = sbr.rel (0) target = $region29
  $region28: #{tpu_custom_call.1} parent=0 // pred_region
    _
  $region29: #{tpu_custom_call.1} parent=0 // pred_fallthru
    _

</llo_original>
